<compile_context>
chip_gen: v7x
topology: tpu7x:2x2x1
jax: 0.10.0
libtpu: 0.0.40
codegen_flags: <defaults>
</compile_context>

<pallas_src>
import jax
import jax.numpy as jnp
from jax.experimental import pallas as pl
from jax.experimental.pallas import tpu as pltpu


LEAKY_SLOPE = 0.01  # torch.nn.LeakyReLU default negative_slope
SUBLANE = 8         # TPU sublane width (f32 second-to-last-dim granularity)


def _round_up(n, m):
    return ((n + m - 1) // m) * m


def _choose_batch_tile(batch, block_batch):
    """Batch tile that is (8, .)-legal, amortizes per-step overhead, and gives the
    grid >= 2 steps (v7x has 2 TensorCores) whenever the batch is big enough."""
    block_batch = max(SUBLANE, _round_up(block_batch, SUBLANE))
    if batch <= SUBLANE:
        # Tiny batch: a full-array block (block dim == array dim) is always legal.
        return batch
    tb = min(block_batch, _round_up(batch, SUBLANE))
    if pl.cdiv(batch, tb) == 1 and batch >= 8 * SUBLANE:
        # A single grid step would leave one v7x TensorCore idle; split the batch.
        tb = _round_up(pl.cdiv(batch, 2), SUBLANE)
    return tb


def _make_ae_kernel(n_enc: int, n_dec: int, dot_dtype):
    """Fused autoencoder kernel: n_enc encoder + n_dec decoder Linear layers.

    refs = [x, (w, b) * (n_enc + n_dec), recon_out, latent_out]
    x and weights arrive in `dot_dtype` (bf16); biases are f32.
    Activations/bias adds are f32 (v5e-safe); only the dot operands are `dot_dtype`.
    """
    n_layers = n_enc + n_dec

    def kernel(*refs):
        x_ref = refs[0]
        recon_ref = refs[-2]
        latent_ref = refs[-1]

        h = x_ref[...]                                  # dot_dtype, fed straight to MXU
        idx = 1
        for li in range(n_layers):
            w = refs[idx][...]                          # (in, out), dot_dtype
            b = refs[idx + 1][...]                      # (1, out), f32
            idx += 2

            # MXU: bf16 x bf16 -> f32 accumulate; bias add in f32 on the VPU.
            h = jnp.dot(h.astype(dot_dtype), w,
                        preferred_element_type=jnp.float32) + b

            if li == n_layers - 1:
                h = jnp.maximum(h, 0.0)                 # final ReLU (decoder tail)
            else:
                h = jnp.maximum(h, LEAKY_SLOPE * h)     # LeakyReLU (2 VALU ops)

            if li == n_enc - 1:
                latent_ref[...] = h.astype(latent_ref.dtype)

        recon_ref[...] = h.astype(recon_ref.dtype)

    return kernel


def simple_fc_ae_forward(x, enc_params, dec_params, *, block_batch=1024,
                         dot_dtype=jnp.bfloat16, out_dtype=None):
    """Fused SimpleFcAE forward pass (eval mode).

    x:          (B, input_dim) float array (pass bf16 to skip the wrapper cast)
    enc_params: list of (W(in,out), b(out,) or (1,out)) for encoder Linear layers
    dec_params: same for decoder Linear layers (W stored as PyTorch weight.T)
    out_dtype:  dtype for recon/latent (default: x.dtype; use bf16 to halve writeback)
    Returns (recon, latent) with exact shapes (B, input_dim), (B, latent_dim).
    """
    n_enc = len(enc_params)
    n_dec = len(dec_params)
    params = list(enc_params) + list(dec_params)

    B, input_dim = x.shape
    latent_dim = enc_params[-1][0].shape[1]
    recon_dim = params[-1][0].shape[1]
    if out_dtype is None:
        out_dtype = x.dtype

    # DMA x in dot_dtype (bf16): halves the dominant HBM read with no accuracy change
    # (the first dot truncates to bf16 anyway).  Skipped if the caller already passes
    # bf16; under an outer jit the cast fuses with x's producer instead of adding a pass.
    x_in = x if x.dtype == dot_dtype else x.astype(dot_dtype)

    operands = [x_in]
    for w, b in params:
        operands.append(w.astype(dot_dtype))                         # bf16 MXU weights
        operands.append(b.reshape(1, -1).astype(jnp.float32))        # f32 bias add

    tb = _choose_batch_tile(B, block_batch)
    grid = (pl.cdiv(B, tb),)   # ragged last tile handled by Pallas (masked writeback)

    # x / outputs walk the batch axis at their TRUE feature width (block last dim ==
    # full array dim is legal, so no 128-lane padding -> no wasted HBM bytes).
    # Weights & biases use constant block indices -> resident in VMEM, no re-DMA.
    in_specs = [pl.BlockSpec((tb, input_dim), lambda i: (i, 0))]
    for op in operands[1:]:
        in_specs.append(pl.BlockSpec(op.shape, lambda i: (0, 0)))

    out_specs = (
        pl.BlockSpec((tb, recon_dim), lambda i: (i, 0)),
        pl.BlockSpec((tb, latent_dim), lambda i: (i, 0)),
    )
    out_shape = (
        jax.ShapeDtypeStruct((B, recon_dim), out_dtype),
        jax.ShapeDtypeStruct((B, latent_dim), out_dtype),
    )

    kernel = _make_ae_kernel(n_enc, n_dec, dot_dtype)

    recon, latent = pl.pallas_call(
        kernel,
        out_shape=out_shape,
        grid=grid,
        in_specs=in_specs,
        out_specs=out_specs,
        compiler_params=pltpu.CompilerParams(
            # Batch tiles are independent -> shard across both TCs on v7x.
            # No vmem_limit override: per-step footprint is only a few MiB even at
            # tb=2048, so the default scoped limit is already generous on all gens.
            dimension_semantics=("parallel",),
        ),
    )(*operands)

    return recon, latent


def _init_linear(key, in_dim, out_dim, dtype=jnp.float32):
    """PyTorch nn.Linear default init: U(-1/sqrt(in), 1/sqrt(in)) for weight and bias."""
    kw, kb = jax.random.split(key)
    bound = 1.0 / jnp.sqrt(jnp.asarray(in_dim, dtype))
    w = jax.random.uniform(kw, (in_dim, out_dim), dtype, minval=-bound, maxval=bound)
    b = jax.random.uniform(kb, (1, out_dim), dtype, minval=-bound, maxval=bound)
    return w, b


def build_params(key, input_dim, layers):
    """Builds encoder/decoder parameters matching SimpleFcAE.__init__ shapes."""
    enc_dims = [input_dim] + list(layers)
    dec_dims = list(reversed(layers)) + [input_dim]

    keys = jax.random.split(key, len(enc_dims) - 1 + len(dec_dims) - 1)
    enc_params, dec_params = [], []
    ki = 0
    for i in range(len(enc_dims) - 1):
        enc_params.append(_init_linear(keys[ki], enc_dims[i], enc_dims[i + 1]))
        ki += 1
    for i in range(len(dec_dims) - 1):
        dec_params.append(_init_linear(keys[ki], dec_dims[i], dec_dims[i + 1]))
        ki += 1
    return enc_params, dec_params


def reference_forward(x, enc_params, dec_params, dot_dtype=jnp.float32):
    """Pure-JAX reference of the PyTorch forward (eval mode).

    With dot_dtype=jnp.bfloat16 it applies the same mixed-precision scheme as the
    kernel (bf16 at the dot boundary, f32 accumulation / elementwise)."""
    params = list(enc_params) + list(dec_params)
    n_enc = len(enc_params)
    n_layers = len(params)
    h = x.astype(jnp.float32)
    latent = None
    for li, (w, b) in enumerate(params):
        h = jnp.dot(h.astype(dot_dtype), w.astype(dot_dtype),
                    preferred_element_type=jnp.float32) + b.reshape(1, -1)
        if li == n_layers - 1:
            h = jnp.maximum(h, 0.0)
        else:
            h = jnp.where(h > 0, h, LEAKY_SLOPE * h)
        if li == n_enc - 1:
            latent = h
    return h, latent


if __name__ == "__main__":
    key = jax.random.PRNGKey(0)
    k_x, k_p = jax.random.split(key)

    batch = 2
    input_dim = 32
    layers = [32, 16]  # SimpleFcAE(layers=[32, 16], input_dim=32, dropout=0.5, use_bn=False)

    x = jax.random.normal(k_x, (batch, input_dim), dtype=jnp.float32)
    enc_params, dec_params = build_params(k_p, input_dim, layers)

    recon, latent = simple_fc_ae_forward(x, enc_params, dec_params)
    recon = jax.block_until_ready(recon)
    latent = jax.block_until_ready(latent)

    assert recon.shape == (batch, input_dim)
    assert latent.shape == (batch, layers[-1])

    # Tight check against a reference using the same bf16-at-dot-boundary scheme.
    recon_mp, latent_mp = reference_forward(x, enc_params, dec_params,
                                            dot_dtype=jnp.bfloat16)
    assert jnp.allclose(recon, recon_mp, atol=1e-3, rtol=1e-3)
    assert jnp.allclose(latent, latent_mp, atol=1e-3, rtol=1e-3)

    # Loose check against the full-f32 (PyTorch-equivalent) reference.
    recon_f32, latent_f32 = reference_forward(x, enc_params, dec_params,
                                              dot_dtype=jnp.float32)
    assert jnp.allclose(recon, recon_f32, atol=1e-1, rtol=1e-1)
    assert jnp.allclose(latent, latent_f32, atol=1e-1, rtol=1e-1)

    print("KERNEL_OK")
</pallas_src>

<mosaic_0001>
module attributes {stable_mosaic.version = 11 : i64} {
  func.func @kernel(%arg0: i32, %arg1: memref<2x32xbf16, #tpu.memory_space<vmem>>, %arg2: memref<32x32xbf16, #tpu.memory_space<vmem>>, %arg3: memref<1x32xf32, #tpu.memory_space<vmem>>, %arg4: memref<32x16xbf16, #tpu.memory_space<vmem>>, %arg5: memref<1x16xf32, #tpu.memory_space<vmem>>, %arg6: memref<16x32xbf16, #tpu.memory_space<vmem>>, %arg7: memref<1x32xf32, #tpu.memory_space<vmem>>, %arg8: memref<32x32xbf16, #tpu.memory_space<vmem>>, %arg9: memref<1x32xf32, #tpu.memory_space<vmem>>, %arg10: memref<2x32xf32, #tpu.memory_space<vmem>>, %arg11: memref<2x16xf32, #tpu.memory_space<vmem>>) attributes {dimension_semantics = [#tpu.dimension_semantics<parallel>], iteration_bounds = array<i64: 1>, scalar_prefetch = 0 : i64, scratch_operands = 0 : i64, tpu.core_type = #tpu.core_type<tc>, window_params = [{transform_indices = @transform_0, window_bounds = array<i64: 2, 32>}, {pipeline_mode = #tpu.pipeline_mode<synchronous>, transform_indices = @transform_1, window_bounds = array<i64: 32, 32>}, {pipeline_mode = #tpu.pipeline_mode<synchronous>, transform_indices = @transform_2, window_bounds = array<i64: 1, 32>}, {pipeline_mode = #tpu.pipeline_mode<synchronous>, transform_indices = @transform_3, window_bounds = array<i64: 32, 16>}, {pipeline_mode = #tpu.pipeline_mode<synchronous>, transform_indices = @transform_4, window_bounds = array<i64: 1, 16>}, {pipeline_mode = #tpu.pipeline_mode<synchronous>, transform_indices = @transform_5, window_bounds = array<i64: 16, 32>}, {pipeline_mode = #tpu.pipeline_mode<synchronous>, transform_indices = @transform_6, window_bounds = array<i64: 1, 32>}, {pipeline_mode = #tpu.pipeline_mode<synchronous>, transform_indices = @transform_7, window_bounds = array<i64: 32, 32>}, {pipeline_mode = #tpu.pipeline_mode<synchronous>, transform_indices = @transform_8, window_bounds = array<i64: 1, 32>}, {transform_indices = @transform_9, window_bounds = array<i64: 2, 32>}, {transform_indices = @transform_10, window_bounds = array<i64: 2, 16>}]} {
    %c0 = arith.constant 0 : index
    %c0_0 = arith.constant 0 : index
    %0 = vector.load %arg1[%c0, %c0_0] : memref<2x32xbf16, #tpu.memory_space<vmem>>, vector<2x32xbf16>
    %c0_1 = arith.constant 0 : index
    %c0_2 = arith.constant 0 : index
    %1 = vector.load %arg2[%c0_1, %c0_2] : memref<32x32xbf16, #tpu.memory_space<vmem>>, vector<32x32xbf16>
    %c0_3 = arith.constant 0 : index
    %c0_4 = arith.constant 0 : index
    %2 = vector.load %arg3[%c0_3, %c0_4] : memref<1x32xf32, #tpu.memory_space<vmem>>, vector<1x32xf32>
    %cst = arith.constant dense<0.000000e+00> : vector<2x32xf32>
    %3 = tpu.matmul %0, %1, %cst {dimension_numbers = #tpu.dot_dimension_numbers<[1], [0], [0], [1], [0, 0, 1, 1], [], []>} : vector<2x32xbf16>, vector<32x32xbf16>, vector<2x32xf32> -> vector<2x32xf32>
    %4 = vector.broadcast %2 : vector<1x32xf32> to vector<2x32xf32>
    %5 = arith.addf %3, %4 : vector<2x32xf32>
    %cst_5 = arith.constant 0.00999999977 : f32
    %6 = vector.broadcast %cst_5 : f32 to vector<2x32xf32>
    %7 = arith.mulf %6, %5 : vector<2x32xf32>
    %8 = arith.maximumf %5, %7 : vector<2x32xf32>
    %c0_6 = arith.constant 0 : index
    %c0_7 = arith.constant 0 : index
    %9 = vector.load %arg4[%c0_6, %c0_7] : memref<32x16xbf16, #tpu.memory_space<vmem>>, vector<32x16xbf16>
    %c0_8 = arith.constant 0 : index
    %c0_9 = arith.constant 0 : index
    %10 = vector.load %arg5[%c0_8, %c0_9] : memref<1x16xf32, #tpu.memory_space<vmem>>, vector<1x16xf32>
    %11 = arith.truncf %8 : vector<2x32xf32> to vector<2x32xbf16>
    %cst_10 = arith.constant dense<0.000000e+00> : vector<2x16xf32>
    %12 = tpu.matmul %11, %9, %cst_10 {dimension_numbers = #tpu.dot_dimension_numbers<[1], [0], [0], [1], [0, 0, 1, 1], [], []>} : vector<2x32xbf16>, vector<32x16xbf16>, vector<2x16xf32> -> vector<2x16xf32>
    %13 = vector.broadcast %10 : vector<1x16xf32> to vector<2x16xf32>
    %14 = arith.addf %12, %13 : vector<2x16xf32>
    %cst_11 = arith.constant 0.00999999977 : f32
    %15 = vector.broadcast %cst_11 : f32 to vector<2x16xf32>
    %16 = arith.mulf %15, %14 : vector<2x16xf32>
    %17 = arith.maximumf %14, %16 : vector<2x16xf32>
    %c0_12 = arith.constant 0 : index
    %c0_13 = arith.constant 0 : index
    %18 = vector.load %arg11[%c0_12, %c0_13] : memref<2x16xf32, #tpu.memory_space<vmem>>, vector<2x16xf32>
    tpu.vector_store %arg11[%c0_12, %c0_13], %17 {strides = array<i32>} : memref<2x16xf32, #tpu.memory_space<vmem>>, vector<2x16xf32>,
    %c0_14 = arith.constant 0 : index
    %c0_15 = arith.constant 0 : index
    %19 = vector.load %arg6[%c0_14, %c0_15] : memref<16x32xbf16, #tpu.memory_space<vmem>>, vector<16x32xbf16>
    %c0_16 = arith.constant 0 : index
    %c0_17 = arith.constant 0 : index
    %20 = vector.load %arg7[%c0_16, %c0_17] : memref<1x32xf32, #tpu.memory_space<vmem>>, vector<1x32xf32>
    %21 = arith.truncf %17 : vector<2x16xf32> to vector<2x16xbf16>
    %cst_18 = arith.constant dense<0.000000e+00> : vector<2x32xf32>
    %22 = tpu.matmul %21, %19, %cst_18 {dimension_numbers = #tpu.dot_dimension_numbers<[1], [0], [0], [1], [0, 0, 1, 1], [], []>} : vector<2x16xbf16>, vector<16x32xbf16>, vector<2x32xf32> -> vector<2x32xf32>
    %23 = vector.broadcast %20 : vector<1x32xf32> to vector<2x32xf32>
    %24 = arith.addf %22, %23 : vector<2x32xf32>
    %cst_19 = arith.constant 0.00999999977 : f32
    %25 = vector.broadcast %cst_19 : f32 to vector<2x32xf32>
    %26 = arith.mulf %25, %24 : vector<2x32xf32>
    %27 = arith.maximumf %24, %26 : vector<2x32xf32>
    %c0_20 = arith.constant 0 : index
    %c0_21 = arith.constant 0 : index
    %28 = vector.load %arg8[%c0_20, %c0_21] : memref<32x32xbf16, #tpu.memory_space<vmem>>, vector<32x32xbf16>
    %c0_22 = arith.constant 0 : index
    %c0_23 = arith.constant 0 : index
    %29 = vector.load %arg9[%c0_22, %c0_23] : memref<1x32xf32, #tpu.memory_space<vmem>>, vector<1x32xf32>
    %30 = arith.truncf %27 : vector<2x32xf32> to vector<2x32xbf16>
    %cst_24 = arith.constant dense<0.000000e+00> : vector<2x32xf32>
    %31 = tpu.matmul %30, %28, %cst_24 {dimension_numbers = #tpu.dot_dimension_numbers<[1], [0], [0], [1], [0, 0, 1, 1], [], []>} : vector<2x32xbf16>, vector<32x32xbf16>, vector<2x32xf32> -> vector<2x32xf32>
    %32 = vector.broadcast %29 : vector<1x32xf32> to vector<2x32xf32>
    %33 = arith.addf %31, %32 : vector<2x32xf32>
    %cst_25 = arith.constant 0.000000e+00 : f32
    %34 = vector.broadcast %cst_25 : f32 to vector<2x32xf32>
    %35 = arith.maximumf %33, %34 : vector<2x32xf32>
    %c0_26 = arith.constant 0 : index
    %c0_27 = arith.constant 0 : index
    %36 = vector.load %arg10[%c0_26, %c0_27] : memref<2x32xf32, #tpu.memory_space<vmem>>, vector<2x32xf32>
    tpu.vector_store %arg10[%c0_26, %c0_27], %35 {strides = array<i32>} : memref<2x32xf32, #tpu.memory_space<vmem>>, vector<2x32xf32>,
    return
  }
  func.func @transform_0(%arg0: i32) -> (i32, i32) {
    %c0_i32 = arith.constant 0 : i32
    %c0_i32_0 = arith.constant 0 : i32
    return %arg0, %c0_i32 : i32, i32
  }
  func.func @transform_1(%arg0: i32) -> (i32, i32) {
    %c0_i32 = arith.constant 0 : i32
    %c0_i32_0 = arith.constant 0 : i32
    %c0_i32_1 = arith.constant 0 : i32
    return %c0_i32, %c0_i32_0 : i32, i32
  }
  func.func @transform_2(%arg0: i32) -> (i32, i32) {
    %c0_i32 = arith.constant 0 : i32
    %c0_i32_0 = arith.constant 0 : i32
    %c0_i32_1 = arith.constant 0 : i32
    return %c0_i32, %c0_i32_0 : i32, i32
  }
  func.func @transform_3(%arg0: i32) -> (i32, i32) {
    %c0_i32 = arith.constant 0 : i32
    %c0_i32_0 = arith.constant 0 : i32
    %c0_i32_1 = arith.constant 0 : i32
    return %c0_i32, %c0_i32_0 : i32, i32
  }
  func.func @transform_4(%arg0: i32) -> (i32, i32) {
    %c0_i32 = arith.constant 0 : i32
    %c0_i32_0 = arith.constant 0 : i32
    %c0_i32_1 = arith.constant 0 : i32
    return %c0_i32, %c0_i32_0 : i32, i32
  }
  func.func @transform_5(%arg0: i32) -> (i32, i32) {
    %c0_i32 = arith.constant 0 : i32
    %c0_i32_0 = arith.constant 0 : i32
    %c0_i32_1 = arith.constant 0 : i32
    return %c0_i32, %c0_i32_0 : i32, i32
  }
  func.func @transform_6(%arg0: i32) -> (i32, i32) {
    %c0_i32 = arith.constant 0 : i32
    %c0_i32_0 = arith.constant 0 : i32
    %c0_i32_1 = arith.constant 0 : i32
    return %c0_i32, %c0_i32_0 : i32, i32
  }
  func.func @transform_7(%arg0: i32) -> (i32, i32) {
    %c0_i32 = arith.constant 0 : i32
    %c0_i32_0 = arith.constant 0 : i32
    %c0_i32_1 = arith.constant 0 : i32
    return %c0_i32, %c0_i32_0 : i32, i32
  }
  func.func @transform_8(%arg0: i32) -> (i32, i32) {
    %c0_i32 = arith.constant 0 : i32
    %c0_i32_0 = arith.constant 0 : i32
    %c0_i32_1 = arith.constant 0 : i32
    return %c0_i32, %c0_i32_0 : i32, i32
  }
  func.func @transform_9(%arg0: i32) -> (i32, i32) {
    %c0_i32 = arith.constant 0 : i32
    %c0_i32_0 = arith.constant 0 : i32
    return %arg0, %c0_i32 : i32, i32
  }
  func.func @transform_10(%arg0: i32) -> (i32, i32) {
    %c0_i32 = arith.constant 0 : i32
    %c0_i32_0 = arith.constant 0 : i32
    return %arg0, %c0_i32 : i32, i32
  }
}

</mosaic_0001>

<llo_original>
// kernel: tpu_custom_call.1
$region0: #{tpu_custom_call.1}
  #allocation0 [shape = 'u32[]', space=smem, size = 0x4, offset = 0x4, fixed_abs, tag = 'smem constant byte address 0x4 - core index']
  #allocation1 [shape = 'u32[144,128]{1,0:T(1,128)}', space=vmem, size = 0x12000, scoped, tag = 'internal scratch']
  %s0 = inlined_call_operand.vmem [shape: bf16[2,32], index: 0, kind: input, shape index: {}]
  %s1 = inlined_call_operand.vmem [shape: bf16[32,32], index: 1, kind: input, shape index: {}]
  %s2 = inlined_call_operand.vmem [shape: f32[1,32], index: 2, kind: input, shape index: {}]
  %s3 = inlined_call_operand.vmem [shape: bf16[32,16], index: 3, kind: input, shape index: {}]
  %s4 = inlined_call_operand.hbm [shape: f32[1,16], index: 4, kind: input, shape index: {}]
  %s5 = inlined_call_operand.vmem [shape: bf16[16,32], index: 5, kind: input, shape index: {}]
  %s6 = inlined_call_operand.vmem [shape: f32[1,32], index: 6, kind: input, shape index: {}]
  %s7 = inlined_call_operand.vmem [shape: bf16[32,32], index: 7, kind: input, shape index: {}]
  %s8 = inlined_call_operand.vmem [shape: f32[1,32], index: 8, kind: input, shape index: {}]
  %s9 = inlined_call_operand.hbm [shape: f32[2,32], index: 9, kind: output, shape index: {0}]
  %s10 = inlined_call_operand.hbm [shape: f32[2,16], index: 10, kind: output, shape index: {1}]
  %11 = xla_tuple %s9, %s10
  %s12 = sld [smem:[#allocation0]]
  $region58: #{tpu_custom_call.1} parent=0
    _
  %s14 = ssub.s32 1, %s12
  %s15 = scalar_select 0, %s14, %s12
  $region1: #{tpu_custom_call.1} parent=0
    #allocation2 [shape = 'u8[512]{0}', space=vmem, size = 0x400, scoped, tag = 'input window, operand 4, single buffered']
    #allocation3 [shape = 's32[1]{0}', space=sflag, size = 0x4, scoped, tag = 'scoped memory for tpu_custom_call.1']
    #allocation4 [shape = 's32[1]{0}', space=sflag, size = 0x4, scoped, tag = 'scoped memory for tpu_custom_call.1']
    #allocation5 [shape = 'u8[1024]{0}', space=vmem, size = 0x400, scoped, tag = 'output window, operand 0, single buffered']
    #allocation6 [shape = 'u8[1024]{0}', space=vmem, size = 0x400, scoped, tag = 'output window, operand 1, single buffered']
    #allocation7 [shape = 's32[1]{0}', space=sflag, size = 0x4, scoped, tag = 'scoped memory for tpu_custom_call.1']
    %16 = vsyncpa [#allocation3], 0
    %17 = vsyncpa [#allocation4], 0
    %18 = vsyncpa [#allocation7], 0
    // Predicated region
    $region2: #{tpu_custom_call.1} parent=1 // pred_check
      _
    $region3: #{tpu_custom_call.1} parent=1 // pred_check_branch
      %20 = sbr.rel (0) target = $region5
    $region4: #{tpu_custom_call.1} parent=1 // pred_region
      _
    $region5: #{tpu_custom_call.1} parent=1 // pred_fallthru
      _
    // Predicated region
    $region6: #{tpu_custom_call.1} parent=1 // pred_check
      _
    $region7: #{tpu_custom_call.1} parent=1 // pred_check_branch
      %22 = sbr.rel (0) target = $region9
    $region8: #{tpu_custom_call.1} parent=1 // pred_region
      _
    $region9: #{tpu_custom_call.1} parent=1 // pred_fallthru
      _
    // Predicated region
    $region10: #{tpu_custom_call.1} parent=1 // pred_check
      _
    $region11: #{tpu_custom_call.1} parent=1 // pred_check_branch
      %24 = sbr.rel (0) target = $region13
    $region12: #{tpu_custom_call.1} parent=1 // pred_region
      _
    $region13: #{tpu_custom_call.1} parent=1 // pred_fallthru
      _
    // Predicated region
    $region14: #{tpu_custom_call.1} parent=1 // pred_check
      _
    $region15: #{tpu_custom_call.1} parent=1 // pred_check_branch
      %26 = sbr.rel (0) target = $region17
    $region16: #{tpu_custom_call.1} parent=1 // pred_region
      _
    $region17: #{tpu_custom_call.1} parent=1 // pred_fallthru
      _
    // Predicated region
    $region18: #{tpu_custom_call.1} parent=1 // pred_check
      _
    $region19: #{tpu_custom_call.1} parent=1 // pred_check_branch
      %28 = sbr.rel (0) target = $region21
    $region20: #{tpu_custom_call.1} parent=1 // pred_region
      %s30 = ssub.s32 16, 16
      %31 = vsyncadd [#allocation3], %s30
      %s33 = sshll.u32 [#allocation2], 4
      %s34 = int_to_ptr.vmem [resolvable:$true] %s33
      %36 = dma.hbm_to_vmem [thread:$0]  %s4, 16, %s34, [#allocation3]
    $region21: #{tpu_custom_call.1} parent=1 // pred_fallthru
      _
    // Predicated region
    $region22: #{tpu_custom_call.1} parent=1 // pred_check
      _
    $region23: #{tpu_custom_call.1} parent=1 // pred_check_branch
      %38 = sbr.rel (0) target = $region25
    $region24: #{tpu_custom_call.1} parent=1 // pred_region
      _
    $region25: #{tpu_custom_call.1} parent=1 // pred_fallthru
      _
    // Predicated region
    $region26: #{tpu_custom_call.1} parent=1 // pred_check
      _
    $region27: #{tpu_custom_call.1} parent=1 // pred_check_branch
      %40 = sbr.rel (0) target = $region29
    $region28: #{tpu_custom_call.1} parent=1 // pred_region
      _
    $region29: #{tpu_custom_call.1} parent=1 // pred_fallthru
      _
    // Predicated region
    $region30: #{tpu_custom_call.1} parent=1 // pred_check
      _
    $region31: #{tpu_custom_call.1} parent=1 // pred_check_branch
      %42 = sbr.rel (0) target = $region33
    $region32: #{tpu_custom_call.1} parent=1 // pred_region
      _
    $region33: #{tpu_custom_call.1} parent=1 // pred_fallthru
      _
    // Predicated region
    $region34: #{tpu_custom_call.1} parent=1 // pred_check
      _
    $region35: #{tpu_custom_call.1} parent=1 // pred_check_branch
      %44 = sbr.rel (0) target = $region37
    $region36: #{tpu_custom_call.1} parent=1 // pred_region
      _
    $region37: #{tpu_custom_call.1} parent=1 // pred_fallthru
      _
    // Predicated region
    $region38: #{tpu_custom_call.1} parent=1 // pred_check
      _
    $region39: #{tpu_custom_call.1} parent=1 // pred_check_branch
      %46 = sbr.rel (0) target = $region41
    $region40: #{tpu_custom_call.1} parent=1 // pred_region
      %47 = dma.done [#allocation3], 16
    $region41: #{tpu_custom_call.1} parent=1 // pred_fallthru
      _
    %v49 = vld [vmem:[%s0] sm:$0x1]
    %v50 = vld [vmem:[%s1] sm:$0xf]
    %v51 = vld [vmem:[%s1 + $0x4] sm:$0xf]
    %v52 = vld [vmem:[%s1 + $0x8] sm:$0xf]
    %v53 = vld [vmem:[%s1 + $0xc] sm:$0xf]
    %v54 = vld [vmem:[%s2] sm:$0x1]
    %v56 = vlaneseq
    %v57 = vshrl.u32 %v56, 7
    %v58 = vsub.s32 0, %v57
    %v59 = vrot.slane %v54, %v58
    %v65 = vunpack.c.l.b16 %v50
    %v66 = vunpack.c.l.b16 %v51
    %v67 = vunpack.c.l.b16 %v52
    %v68 = vunpack.c.l.b16 %v53
    %v69 = vpack.c.b16 %v66, %v65
    %v70 = vpack.c.b16 %v68, %v67
    %vm73 = vcmask 261120
    %v75 = vsel %vm73, %v49, 0
    %77 = vmatprep.subr.bf16.mxu0 0
    %78 = vmatpush1.bf16.msra.mxu0 %v69
    %79 = vmatprep.subr.bf16.mxu0 0
    %80 = vmatpush1.bf16.msra.mxu0 %v70
    %81 = vmatprep.subr.bf16.mxu0 0
    %82 = vmatpush1.bf16.msra.mxu0 0
    %83 = vmatprep.subr.bf16.mxu0 0
    %84 = vmatpush1.bf16.msra.mxu0 0
    %85 = vmatprep.subr.bf16.mxu0 0
    %86 = vmatpush1.bf16.msra.mxu0 0
    %87 = vmatprep.subr.bf16.mxu0 0
    %88 = vmatpush1.bf16.msra.mxu0 0
    %89 = vmatprep.subr.bf16.mxu0 0
    %90 = vmatpush1.bf16.msra.mxu0 0
    %91 = vmatprep.subr.bf16.mxu0 0
    %92 = vmatpush1.bf16.msra.mxu0 0
    %93 = vmatprep.subr.bf16.mxu0 0
    %94 = vmatpush1.bf16.msra.mxu0 0
    %95 = vmatprep.subr.bf16.mxu0 0
    %96 = vmatpush1.bf16.msra.mxu0 0
    %97 = vmatprep.subr.bf16.mxu0 0
    %98 = vmatpush1.bf16.msra.mxu0 0
    %99 = vmatprep.subr.bf16.mxu0 0
    %100 = vmatpush1.bf16.msra.mxu0 0
    %101 = vmatprep.subr.bf16.mxu0 0
    %102 = vmatpush1.bf16.msra.mxu0 0
    %103 = vmatprep.subr.bf16.mxu0 0
    %104 = vmatpush1.bf16.msra.mxu0 0
    %105 = vmatprep.subr.bf16.mxu0 0
    %106 = vmatpush1.bf16.msra.mxu0 0
    %107 = vmatprep.subr.bf16.mxu0 0
    %108 = vmatpush1.bf16.msra.mxu0 0
    %109 = vmatprep.mubr.bf16.mxu0 0
    %110 = vmatmul.mubr.bf16.gmra.mrb[0].mxu0 %v75
    %v111 = vpop.f32.mrb[0].mxu0
    %v112 = vadd.f32 %v59, %v111
    %v113 = vpop.f32.mrb[0].mxu0
    %v114 = vpop.f32.mrb[0].mxu0
    %v115 = vpop.f32.mrb[0].mxu0
    %116 = vdwg.mxu0
    %v117 = vmul.f32 %v112, 0.01
    %v118 = vmax.f32 %v112, %v117
    %v119 = vld [vmem:[%s3] sm:$0xf]
    %v120 = vld [vmem:[%s3 + $0x4] sm:$0xf]
    %v121 = vld [vmem:[%s3 + $0x8] sm:$0xf]
    %v122 = vld [vmem:[%s3 + $0xc] sm:$0xf]
    %v123 = vld [vmem:[#allocation2] sm:$0x1]
    %v124 = vpack.c.bf16 %v118, %v118
    %v126 = vlaneseq
    %v127 = vshrl.u32 %v126, 7
    %v128 = vsub.s32 0, %v127
    %v129 = vrot.slane %v123, %v128
    %v135 = vunpack.c.l.b16 %v119
    %v136 = vunpack.c.l.b16 %v120
    %v137 = vunpack.c.l.b16 %v121
    %v138 = vunpack.c.l.b16 %v122
    %v139 = vpack.c.b16 %v136, %v135
    %v140 = vpack.c.b16 %v138, %v137
    %v144 = vsel %vm73, %v124, 0
    %146 = vmatprep.subr.bf16.mxu0 0
    %147 = vmatpush1.bf16.msra.mxu0 %v139
    %148 = vmatprep.subr.bf16.mxu0 0
    %149 = vmatpush1.bf16.msra.mxu0 %v140
    %150 = vmatprep.subr.bf16.mxu0 0
    %151 = vmatpush1.bf16.msra.mxu0 0
    %152 = vmatprep.subr.bf16.mxu0 0
    %153 = vmatpush1.bf16.msra.mxu0 0
    %154 = vmatprep.subr.bf16.mxu0 0
    %155 = vmatpush1.bf16.msra.mxu0 0
    %156 = vmatprep.subr.bf16.mxu0 0
    %157 = vmatpush1.bf16.msra.mxu0 0
    %158 = vmatprep.subr.bf16.mxu0 0
    %159 = vmatpush1.bf16.msra.mxu0 0
    %160 = vmatprep.subr.bf16.mxu0 0
    %161 = vmatpush1.bf16.msra.mxu0 0
    %162 = vmatprep.subr.bf16.mxu0 0
    %163 = vmatpush1.bf16.msra.mxu0 0
    %164 = vmatprep.subr.bf16.mxu0 0
    %165 = vmatpush1.bf16.msra.mxu0 0
    %166 = vmatprep.subr.bf16.mxu0 0
    %167 = vmatpush1.bf16.msra.mxu0 0
    %168 = vmatprep.subr.bf16.mxu0 0
    %169 = vmatpush1.bf16.msra.mxu0 0
    %170 = vmatprep.subr.bf16.mxu0 0
    %171 = vmatpush1.bf16.msra.mxu0 0
    %172 = vmatprep.subr.bf16.mxu0 0
    %173 = vmatpush1.bf16.msra.mxu0 0
    %174 = vmatprep.subr.bf16.mxu0 0
    %175 = vmatpush1.bf16.msra.mxu0 0
    %176 = vmatprep.subr.bf16.mxu0 0
    %177 = vmatpush1.bf16.msra.mxu0 0
    %178 = vmatprep.mubr.bf16.mxu0 0
    %179 = vmatmul.mubr.bf16.gmra.mrb[0].mxu0 %v144
    %v180 = vpop.f32.mrb[0].mxu0
    %v181 = vadd.f32 %v129, %v180
    %v182 = vpop.f32.mrb[0].mxu0
    %v183 = vpop.f32.mrb[0].mxu0
    %v184 = vpop.f32.mrb[0].mxu0
    %185 = vdwg.mxu0
    %v186 = vmul.f32 %v181, 0.01
    %v187 = vmax.f32 %v181, %v186
    %vm188 = vcmask 123904
    %189 = vst.msk [vmem:[#allocation6] sm:$0x3] %vm188, %v187
    %v190 = vld [vmem:[%s5] sm:$0xf]
    %v191 = vld [vmem:[%s5 + $0x4] sm:$0xf]
    %v192 = vld [vmem:[%s6] sm:$0x1]
    %v193 = vpack.c.bf16 %v187, %v187
    %v195 = vlaneseq
    %v196 = vshrl.u32 %v195, 7
    %v197 = vsub.s32 0, %v196
    %v198 = vrot.slane %v192, %v197
    %v202 = vunpack.c.l.b16 %v190
    %v203 = vunpack.c.l.b16 %v191
    %v204 = vpack.c.b16 %v203, %v202
    %vm206 = vcmask 130048
    %v208 = vsel %vm206, %v193, 0
    %210 = vmatprep.subr.bf16.mxu0 0
    %211 = vmatpush1.bf16.msra.mxu0 %v204
    %212 = vmatprep.subr.bf16.mxu0 0
    %213 = vmatpush1.bf16.msra.mxu0 0
    %214 = vmatprep.subr.bf16.mxu0 0
    %215 = vmatpush1.bf16.msra.mxu0 0
    %216 = vmatprep.subr.bf16.mxu0 0
    %217 = vmatpush1.bf16.msra.mxu0 0
    %218 = vmatprep.subr.bf16.mxu0 0
    %219 = vmatpush1.bf16.msra.mxu0 0
    %220 = vmatprep.subr.bf16.mxu0 0
    %221 = vmatpush1.bf16.msra.mxu0 0
    %222 = vmatprep.subr.bf16.mxu0 0
    %223 = vmatpush1.bf16.msra.mxu0 0
    %224 = vmatprep.subr.bf16.mxu0 0
    %225 = vmatpush1.bf16.msra.mxu0 0
    %226 = vmatprep.subr.bf16.mxu0 0
    %227 = vmatpush1.bf16.msra.mxu0 0
    %228 = vmatprep.subr.bf16.mxu0 0
    %229 = vmatpush1.bf16.msra.mxu0 0
    %230 = vmatprep.subr.bf16.mxu0 0
    %231 = vmatpush1.bf16.msra.mxu0 0
    %232 = vmatprep.subr.bf16.mxu0 0
    %233 = vmatpush1.bf16.msra.mxu0 0
    %234 = vmatprep.subr.bf16.mxu0 0
    %235 = vmatpush1.bf16.msra.mxu0 0
    %236 = vmatprep.subr.bf16.mxu0 0
    %237 = vmatpush1.bf16.msra.mxu0 0
    %238 = vmatprep.subr.bf16.mxu0 0
    %239 = vmatpush1.bf16.msra.mxu0 0
    %240 = vmatprep.subr.bf16.mxu0 0
    %241 = vmatpush1.bf16.msra.mxu0 0
    %242 = vmatprep.mubr.bf16.mxu0 0
    %243 = vmatmul.mubr.bf16.gmra.mrb[0].mxu0 %v208
    %v244 = vpop.f32.mrb[0].mxu0
    %v245 = vadd.f32 %v198, %v244
    %v246 = vpop.f32.mrb[0].mxu0
    %v247 = vpop.f32.mrb[0].mxu0
    %v248 = vpop.f32.mrb[0].mxu0
    %249 = vdwg.mxu0
    %v250 = vmul.f32 %v245, 0.01
    %v251 = vmax.f32 %v245, %v250
    %v252 = vld [vmem:[%s7] sm:$0xf]
    %v253 = vld [vmem:[%s7 + $0x4] sm:$0xf]
    %v254 = vld [vmem:[%s7 + $0x8] sm:$0xf]
    %v255 = vld [vmem:[%s7 + $0xc] sm:$0xf]
    %v256 = vld [vmem:[%s8] sm:$0x1]
    %v257 = vpack.c.bf16 %v251, %v251
    %v259 = vlaneseq
    %v260 = vshrl.u32 %v259, 7
    %v261 = vsub.s32 0, %v260
    %v262 = vrot.slane %v256, %v261
    %v268 = vunpack.c.l.b16 %v252
    %v269 = vunpack.c.l.b16 %v253
    %v270 = vunpack.c.l.b16 %v254
    %v271 = vunpack.c.l.b16 %v255
    %v272 = vpack.c.b16 %v269, %v268
    %v273 = vpack.c.b16 %v271, %v270
    %v277 = vsel %vm73, %v257, 0
    %279 = vmatprep.subr.bf16.mxu0 0
    %280 = vmatpush1.bf16.msra.mxu0 %v272
    %281 = vmatprep.subr.bf16.mxu0 0
    %282 = vmatpush1.bf16.msra.mxu0 %v273
    %283 = vmatprep.subr.bf16.mxu0 0
    %284 = vmatpush1.bf16.msra.mxu0 0
    %285 = vmatprep.subr.bf16.mxu0 0
    %286 = vmatpush1.bf16.msra.mxu0 0
    %287 = vmatprep.subr.bf16.mxu0 0
    %288 = vmatpush1.bf16.msra.mxu0 0
    %289 = vmatprep.subr.bf16.mxu0 0
    %290 = vmatpush1.bf16.msra.mxu0 0
    %291 = vmatprep.subr.bf16.mxu0 0
    %292 = vmatpush1.bf16.msra.mxu0 0
    %293 = vmatprep.subr.bf16.mxu0 0
    %294 = vmatpush1.bf16.msra.mxu0 0
    %295 = vmatprep.subr.bf16.mxu0 0
    %296 = vmatpush1.bf16.msra.mxu0 0
    %297 = vmatprep.subr.bf16.mxu0 0
    %298 = vmatpush1.bf16.msra.mxu0 0
    %299 = vmatprep.subr.bf16.mxu0 0
    %300 = vmatpush1.bf16.msra.mxu0 0
    %301 = vmatprep.subr.bf16.mxu0 0
    %302 = vmatpush1.bf16.msra.mxu0 0
    %303 = vmatprep.subr.bf16.mxu0 0
    %304 = vmatpush1.bf16.msra.mxu0 0
    %305 = vmatprep.subr.bf16.mxu0 0
    %306 = vmatpush1.bf16.msra.mxu0 0
    %307 = vmatprep.subr.bf16.mxu0 0
    %308 = vmatpush1.bf16.msra.mxu0 0
    %309 = vmatprep.subr.bf16.mxu0 0
    %310 = vmatpush1.bf16.msra.mxu0 0
    %311 = vmatprep.mubr.bf16.mxu0 0
    %312 = vmatmul.mubr.bf16.gmra.mrb[0].mxu0 %v277
    %v313 = vpop.f32.mrb[0].mxu0
    %v314 = vadd.f32 %v262, %v313
    %v315 = vpop.f32.mrb[0].mxu0
    %v316 = vpop.f32.mrb[0].mxu0
    %v317 = vpop.f32.mrb[0].mxu0
    %318 = vdwg.mxu0
    %v319 = vmax.f32 %v314, 0.0
    %vm320 = vcmask 254976
    %321 = vst.msk [vmem:[#allocation5] sm:$0x3] %vm320, %v319
    // Predicated region
    $region42: #{tpu_custom_call.1} parent=1 // pred_check
      _
    $region43: #{tpu_custom_call.1} parent=1 // pred_check_branch
      %323 = sbr.rel (0) target = $region45
    $region44: #{tpu_custom_call.1} parent=1 // pred_region
      %s325 = ssub.s32 32, 32
      %326 = vsyncadd [#allocation4], %s325
      %s328 = sshll.u32 [#allocation5], 4
      %s329 = int_to_ptr.vmem [resolvable:$true] %s328
      %331 = dma.vmem_to_hbm [thread:$0]  %s329, 32, %s9, [#allocation4]
    $region45: #{tpu_custom_call.1} parent=1 // pred_fallthru
      _
    // Predicated region
    $region46: #{tpu_custom_call.1} parent=1 // pred_check
      _
    $region47: #{tpu_custom_call.1} parent=1 // pred_check_branch
      %333 = sbr.rel (0) target = $region49
    $region48: #{tpu_custom_call.1} parent=1 // pred_region
      %s335 = ssub.s32 32, 32
      %336 = vsyncadd [#allocation7], %s335
      %s338 = sshll.u32 [#allocation6], 4
      %s339 = int_to_ptr.vmem [resolvable:$true] %s338
      %341 = dma.vmem_to_hbm [thread:$0]  %s339, 32, %s10, [#allocation7]
    $region49: #{tpu_custom_call.1} parent=1 // pred_fallthru
      _
    // Predicated region
    $region50: #{tpu_custom_call.1} parent=1 // pred_check
      _
    $region51: #{tpu_custom_call.1} parent=1 // pred_check_branch
      %343 = sbr.rel (0) target = $region53
    $region52: #{tpu_custom_call.1} parent=1 // pred_region
      %344 = dma.done [#allocation4], 32
    $region53: #{tpu_custom_call.1} parent=1 // pred_fallthru
      _
    // Predicated region
    $region54: #{tpu_custom_call.1} parent=1 // pred_check
      _
    $region55: #{tpu_custom_call.1} parent=1 // pred_check_branch
      %346 = sbr.rel (0) target = $region57
    $region56: #{tpu_custom_call.1} parent=1 // pred_region
      %347 = dma.done [#allocation7], 32
    $region57: #{tpu_custom_call.1} parent=1 // pred_fallthru
      _
    %348 = vsyncpa [#allocation3], 1
    %349 = vsyncpa [#allocation4], 1
    %350 = vsyncpa [#allocation7], 1

</llo_original>
